<compile_context>
chip_gen: v5e
topology: v5e:2x2
jax: 0.10.0
libtpu: 0.0.40
codegen_flags: <defaults>
</compile_context>

<pallas_src>
import functools

import jax
import jax.numpy as jnp
from jax.experimental import pallas as pl
from jax.experimental.pallas import tpu as pltpu


def _round_up(x, m):
    return (x + m - 1) // m * m


def _cdiv(a, b):
    return (a + b - 1) // b


def _vmem_capacity_bytes():
    """Per-TensorCore VMEM capacity; conservative fallback if unqueryable."""
    try:
        return int(pltpu.get_tpu_info().vmem_capacity_bytes)
    except Exception:  # pragma: no cover - off-TPU / older runtimes
        return 64 * 1024 * 1024  # v7x per-TC size: safe lower bound everywhere


def _vmem_footprint_bytes(tb, tk, tc, D, C_pad, in_itemsize, single_buffer):
    """Approximate VMEM working set of one grid step (incl. pipeline buffers)."""
    v_bufs = 1 if (single_buffer and tk == D and tc == C_pad) else 2
    sb_bufs = 1 if (single_buffer and tc == C_pad) else 2
    return (v_bufs * tk * tc * in_itemsize        # weight tile(s)
            + 2 * tb * tk * in_itemsize           # double-buffered x tile
            + 2 * tb * tc * 4                     # double-buffered f32 out tile
            + tb * tc * 4                         # f32 accumulator scratch
            + sb_bufs * 2 * tc * 4)               # scale + bias rows


def _choose_tiles(B, D, C_pad, in_itemsize, budget, tile_b, single_buffer):
    """Pick (tb, tk, tc): keep weights resident when they fit, else tile N then K."""
    tb = _round_up(min(tile_b, _round_up(B, 8)), 8)
    tk, tc = D, C_pad

    def fits():
        return _vmem_footprint_bytes(
            tb, tk, tc, D, C_pad, in_itemsize, single_buffer) <= budget

    # 1) Shrink the class (lane / N) tile first.  Partial trailing class tiles
    #    are safe: out-of-range output columns are discarded on store.
    while not fits() and tc > 128:
        tc = max(128, (tc // 2) // 128 * 128)
    # 2) Tile the contraction (K) dim.  tk must divide D exactly so the last
    #    block never accumulates out-of-bounds garbage into the reduction.
    if not fits():
        for cand in (2048, 1024, 512, 256, 128):
            if cand < tk and D % cand == 0:
                tk = cand
                if fits():
                    break
        # TODO(synk): if D has no 128-aligned divisor, pad D once in the
        # wrapper before enabling K tiling (not needed for typical dims).
    # 3) Last resort: shrink the batch tile.
    while not fits() and tb > 8:
        tb = max(8, (tb // 2) // 8 * 8)
    return tb, tk, tc


def _maybe_resident_spec(block_shape, index_map, *, resident):
    """BlockSpec; request single buffering when the block is grid-invariant."""
    if resident:
        try:
            return pl.BlockSpec(block_shape, index_map,
                                pipeline_mode=pl.Buffered(buffer_count=1))
        except (TypeError, ValueError, AttributeError):
            pass  # older API surface: fall back to default double buffering
    return pl.BlockSpec(block_shape, index_map)


def _wn_matmul_kernel(x_ref, v_ref, s_ref, b_ref, o_ref):
    """Single K block: o = (x @ v^T) * s + b, f32 accumulation on the MXU."""
    acc = jax.lax.dot_general(
        x_ref[...], v_ref[...],
        dimension_numbers=(((1,), (0,)), ((), ())),    # (tb,K) x (K,tc) -> (tb,tc)
        preferred_element_type=jnp.float32)
    o_ref[...] = (acc * s_ref[...] + b_ref[...]).astype(o_ref.dtype)


def _wn_matmul_kernel_kacc(x_ref, v_ref, s_ref, b_ref, o_ref, acc_ref):
    """K-tiled: f32 VMEM accumulator, scale/bias epilogue on the last K step."""
    k = pl.program_id(2)

    @pl.when(k == 0)
    def _():
        acc_ref[...] = jnp.zeros_like(acc_ref)

    acc_ref[...] += jax.lax.dot_general(
        x_ref[...], v_ref[...],
        dimension_numbers=(((1,), (0,)), ((), ())),
        preferred_element_type=jnp.float32)

    @pl.when(k == pl.num_programs(2) - 1)
    def _():
        o_ref[...] = (acc_ref[...] * s_ref[...] + b_ref[...]).astype(o_ref.dtype)


@functools.partial(
    jax.jit,
    static_argnames=("tile_b", "compute_dtype", "single_buffer_resident"))
def wn_linear(x, v, g, b, *, tile_b=512, compute_dtype=jnp.bfloat16,
              single_buffer_resident=True):
    """Weight-normalized linear: x (B, D), v (C, D), g (C, 1), b (C,) -> (B, C) f32."""
    B, D = x.shape
    C, _ = v.shape
    C_pad = _round_up(C, 128)                      # lane-dense output stores
    in_itemsize = jnp.dtype(compute_dtype).itemsize

    # --- wrapper-side prep (one-time; cache v_t / s_row / b_row in real use) ---
    v32 = v.astype(jnp.float32)
    sq = jnp.sum(v32 * v32, axis=1)                # (C,) row squared norms, f32
    # Zero-norm guard: padded rows -> scale 0.
    # TODO(synk): PyTorch weight_norm would emit NaN/Inf for a genuine all-zero
    # weight row; this kernel intentionally returns 0 for such rows instead.
    s = g.astype(jnp.float32).reshape(-1) * jnp.where(
        sq > 0.0, jax.lax.rsqrt(sq), 0.0)
    s_row = jnp.pad(s, (0, C_pad - C)).reshape(1, C_pad)
    b_row = jnp.pad(b.astype(jnp.float32), (0, C_pad - C)).reshape(1, C_pad)
    # Pre-transpose once so the MXU rhs is canonical (K, N), C_pad on lanes.
    v_t = jnp.pad(v32, ((0, C_pad - C), (0, 0))).T.astype(compute_dtype)  # (D, C_pad)
    x_c = x.astype(compute_dtype)   # no batch padding: Pallas clips partial tile

    # --- generation-aware tiling -------------------------------------------
    vmem_cap = _vmem_capacity_bytes()
    tb, tk, tc = _choose_tiles(B, D, C_pad, in_itemsize,
                               budget=int(vmem_cap * 0.45),
                               tile_b=tile_b,
                               single_buffer=single_buffer_resident)
    grid_b = _cdiv(B, tb)
    grid_c = _cdiv(C_pad, tc)
    grid_k = D // tk
    # v7x megacore: expose >= 2 blocks on a "parallel" axis so both TensorCores
    # get work; costs only one extra ~0.35us grid step on single-core chips.
    if grid_b == 1 and grid_c == 1 and B >= 16:
        tb = _round_up(_cdiv(B, 2), 8)
        grid_b = _cdiv(B, tb)

    fp = _vmem_footprint_bytes(tb, tk, tc, D, C_pad, in_itemsize,
                               single_buffer_resident)
    vmem_limit = min(max(2 * fp, 16 * 1024 * 1024), vmem_cap * 85 // 100)

    v_resident = single_buffer_resident and grid_c == 1 and grid_k == 1
    sb_resident = single_buffer_resident and grid_c == 1
    in_specs = [
        pl.BlockSpec((tb, tk), lambda i, j, k: (i, k)),                   # x tile
        _maybe_resident_spec((tk, tc), lambda i, j, k: (k, j),
                             resident=v_resident),                        # v^T
        _maybe_resident_spec((1, tc), lambda i, j, k: (0, j),
                             resident=sb_resident),                       # scale
        _maybe_resident_spec((1, tc), lambda i, j, k: (0, j),
                             resident=sb_resident),                       # bias
    ]
    out_spec = pl.BlockSpec((tb, tc), lambda i, j, k: (i, j))

    kernel = _wn_matmul_kernel if grid_k == 1 else _wn_matmul_kernel_kacc
    scratch = [] if grid_k == 1 else [pltpu.VMEM((tb, tc), jnp.float32)]

    out_p = pl.pallas_call(
        kernel,
        out_shape=jax.ShapeDtypeStruct((B, C_pad), jnp.float32),
        grid=(grid_b, grid_c, grid_k),
        in_specs=in_specs,
        out_specs=out_spec,
        scratch_shapes=scratch,
        compiler_params=pltpu.CompilerParams(
            dimension_semantics=("parallel", "parallel", "arbitrary"),
            vmem_limit_bytes=int(vmem_limit)),
        cost_estimate=pl.CostEstimate(
            flops=2 * B * C_pad * D,
            bytes_accessed=(B * D + D * C_pad) * in_itemsize
            + (B * C_pad + 2 * C_pad) * 4,
            transcendentals=0),
    )(x_c, v_t, s_row, b_row)

    return out_p[:, :C]


def init_params(key, input_dim, nclass):
    """Synthetic init mirroring the module: xavier_normal-like v, g = ||v||_row, b = 0."""
    (kv,) = jax.random.split(key, 1)
    std = (2.0 / (input_dim + nclass)) ** 0.5
    v = jax.random.normal(kv, (nclass, input_dim), dtype=jnp.float32) * std
    g = jnp.sqrt(jnp.sum(v * v, axis=1, keepdims=True))      # (nclass, 1)
    b = jnp.zeros((nclass,), dtype=jnp.float32)
    return v, g, b


def reference(x, v, g, b):
    norm = jnp.sqrt(jnp.sum(v * v, axis=1, keepdims=True))
    w = g * v / norm
    return x @ w.T + b[None, :]


if __name__ == "__main__":
    key = jax.random.PRNGKey(0)
    kx, kp = jax.random.split(key)

    batch, input_dim, nclass = 8, 32, 10
    x = jax.random.normal(kx, (batch, input_dim), dtype=jnp.float32)
    v, g, b = init_params(kp, input_dim, nclass)
    ref = reference(x, v, g, b)

    def run(compute_dtype):
        try:
            return jax.block_until_ready(
                wn_linear(x, v, g, b, compute_dtype=compute_dtype))
        except Exception:
            # TODO(synk): some jax builds reject pl.Buffered(buffer_count=1) on
            # the auto-pipeline; retry once with default double buffering.
            return jax.block_until_ready(
                wn_linear(x, v, g, b, compute_dtype=compute_dtype,
                          single_buffer_resident=False))

    # Exact path: f32 MXU operands, tight tolerance vs the f32 reference.
    out_f32 = run(jnp.float32)
    assert out_f32.shape == (batch, nclass)
    assert jnp.allclose(out_f32, ref, atol=1e-5, rtol=1e-5), "f32 mismatch"

    # Production path: bf16 MXU operands, f32 accumulate + f32 epilogue.
    out_bf16 = run(jnp.bfloat16)
    assert out_bf16.shape == (batch, nclass)
    assert jnp.allclose(out_bf16, ref, atol=5e-2, rtol=5e-2), "bf16 mismatch"

    print("KERNEL_OK")
</pallas_src>

<mosaic_0001>
module attributes {stable_mosaic.version = 11 : i64} {
  func.func @_wn_matmul_kernel(%arg0: i32, %arg1: i32, %arg2: i32, %arg3: memref<8x32xf32, #tpu.memory_space<vmem>>, %arg4: memref<32x128xf32, #tpu.memory_space<vmem>>, %arg5: memref<1x128xf32, #tpu.memory_space<vmem>>, %arg6: memref<1x128xf32, #tpu.memory_space<vmem>>, %arg7: memref<8x128xf32, #tpu.memory_space<vmem>>) attributes {dimension_semantics = [#tpu.dimension_semantics<parallel>, #tpu.dimension_semantics<parallel>, #tpu.dimension_semantics<arbitrary>], iteration_bounds = array<i64: 1, 1, 1>, scalar_prefetch = 0 : i64, scratch_operands = 0 : i64, tpu.core_type = #tpu.core_type<tc>, window_params = [{transform_indices = @transform_0, window_bounds = array<i64: 8, 32>}, {pipeline_mode = #tpu.pipeline_mode<synchronous>, transform_indices = @transform_1, window_bounds = array<i64: 32, 128>}, {pipeline_mode = #tpu.pipeline_mode<synchronous>, transform_indices = @transform_2, window_bounds = array<i64: 1, 128>}, {pipeline_mode = #tpu.pipeline_mode<synchronous>, transform_indices = @transform_3, window_bounds = array<i64: 1, 128>}, {transform_indices = @transform_4, window_bounds = array<i64: 8, 128>}]} {
    %c0 = arith.constant 0 : index
    %c0_0 = arith.constant 0 : index
    %0 = vector.load %arg3[%c0, %c0_0] : memref<8x32xf32, #tpu.memory_space<vmem>>, vector<8x32xf32>
    %c0_1 = arith.constant 0 : index
    %c0_2 = arith.constant 0 : index
    %1 = vector.load %arg4[%c0_1, %c0_2] : memref<32x128xf32, #tpu.memory_space<vmem>>, vector<32x128xf32>
    %cst = arith.constant dense<0.000000e+00> : vector<8x128xf32>
    %2 = tpu.matmul %0, %1, %cst {dimension_numbers = #tpu.dot_dimension_numbers<[1], [0], [0], [1], [0, 0, 1, 1], [], []>} : vector<8x32xf32>, vector<32x128xf32>, vector<8x128xf32> -> vector<8x128xf32>
    %c0_3 = arith.constant 0 : index
    %c0_4 = arith.constant 0 : index
    %3 = vector.load %arg5[%c0_3, %c0_4] : memref<1x128xf32, #tpu.memory_space<vmem>>, vector<1x128xf32>
    %4 = vector.broadcast %3 : vector<1x128xf32> to vector<8x128xf32>
    %5 = arith.mulf %2, %4 : vector<8x128xf32>
    %c0_5 = arith.constant 0 : index
    %c0_6 = arith.constant 0 : index
    %6 = vector.load %arg6[%c0_5, %c0_6] : memref<1x128xf32, #tpu.memory_space<vmem>>, vector<1x128xf32>
    %7 = vector.broadcast %6 : vector<1x128xf32> to vector<8x128xf32>
    %8 = arith.addf %5, %7 : vector<8x128xf32>
    %c0_7 = arith.constant 0 : index
    %c0_8 = arith.constant 0 : index
    %9 = vector.load %arg7[%c0_7, %c0_8] : memref<8x128xf32, #tpu.memory_space<vmem>>, vector<8x128xf32>
    tpu.vector_store %arg7[%c0_7, %c0_8], %8 {strides = array<i32>} : memref<8x128xf32, #tpu.memory_space<vmem>>, vector<8x128xf32>,
    return
  }
  func.func @transform_0(%arg0: i32, %arg1: i32, %arg2: i32) -> (i32, i32) {
    %c0_i32 = arith.constant 0 : i32
    return %arg0, %arg2 : i32, i32
  }
  func.func @transform_1(%arg0: i32, %arg1: i32, %arg2: i32) -> (i32, i32) {
    %c0_i32 = arith.constant 0 : i32
    return %arg2, %arg1 : i32, i32
  }
  func.func @transform_2(%arg0: i32, %arg1: i32, %arg2: i32) -> (i32, i32) {
    %c0_i32 = arith.constant 0 : i32
    %c0_i32_0 = arith.constant 0 : i32
    return %c0_i32, %arg1 : i32, i32
  }
  func.func @transform_3(%arg0: i32, %arg1: i32, %arg2: i32) -> (i32, i32) {
    %c0_i32 = arith.constant 0 : i32
    %c0_i32_0 = arith.constant 0 : i32
    return %c0_i32, %arg1 : i32, i32
  }
  func.func @transform_4(%arg0: i32, %arg1: i32, %arg2: i32) -> (i32, i32) {
    %c0_i32 = arith.constant 0 : i32
    return %arg0, %arg1 : i32, i32
  }
}

module attributes {stable_mosaic.version = 11 : i64} {
  func.func @_wn_matmul_kernel(%arg0: i32, %arg1: i32, %arg2: i32, %arg3: memref<8x32xf32, #tpu.memory_space<vmem>>, %arg4: memref<32x128xf32, #tpu.memory_space<vmem>>, %arg5: memref<1x128xf32, #tpu.memory_space<vmem>>, %arg6: memref<1x128xf32, #tpu.memory_space<vmem>>, %arg7: memref<8x128xf32, #tpu.memory_space<vmem>>) attributes {dimension_semantics = [#tpu.dimension_semantics<parallel>, #tpu.dimension_semantics<parallel>, #tpu.dimension_semantics<arbitrary>], iteration_bounds = array<i64: 1, 1, 1>, scalar_prefetch = 0 : i64, scratch_operands = 0 : i64, tpu.core_type = #tpu.core_type<tc>, window_params = [{transform_indices = @transform_0, window_bounds = array<i64: 8, 32>}, {transform_indices = @transform_1, window_bounds = array<i64: 32, 128>}, {transform_indices = @transform_2, window_bounds = array<i64: 1, 128>}, {transform_indices = @transform_3, window_bounds = array<i64: 1, 128>}, {transform_indices = @transform_4, window_bounds = array<i64: 8, 128>}]} {
    %c0 = arith.constant 0 : index
    %c0_0 = arith.constant 0 : index
    %0 = vector.load %arg3[%c0, %c0_0] : memref<8x32xf32, #tpu.memory_space<vmem>>, vector<8x32xf32>
    %c0_1 = arith.constant 0 : index
    %c0_2 = arith.constant 0 : index
    %1 = vector.load %arg4[%c0_1, %c0_2] : memref<32x128xf32, #tpu.memory_space<vmem>>, vector<32x128xf32>
    %cst = arith.constant dense<0.000000e+00> : vector<8x128xf32>
    %2 = tpu.matmul %0, %1, %cst {dimension_numbers = #tpu.dot_dimension_numbers<[1], [0], [0], [1], [0, 0, 1, 1], [], []>} : vector<8x32xf32>, vector<32x128xf32>, vector<8x128xf32> -> vector<8x128xf32>
    %c0_3 = arith.constant 0 : index
    %c0_4 = arith.constant 0 : index
    %3 = vector.load %arg5[%c0_3, %c0_4] : memref<1x128xf32, #tpu.memory_space<vmem>>, vector<1x128xf32>
    %4 = vector.broadcast %3 : vector<1x128xf32> to vector<8x128xf32>
    %5 = arith.mulf %2, %4 : vector<8x128xf32>
    %c0_5 = arith.constant 0 : index
    %c0_6 = arith.constant 0 : index
    %6 = vector.load %arg6[%c0_5, %c0_6] : memref<1x128xf32, #tpu.memory_space<vmem>>, vector<1x128xf32>
    %7 = vector.broadcast %6 : vector<1x128xf32> to vector<8x128xf32>
    %8 = arith.addf %5, %7 : vector<8x128xf32>
    %c0_7 = arith.constant 0 : index
    %c0_8 = arith.constant 0 : index
    %9 = vector.load %arg7[%c0_7, %c0_8] : memref<8x128xf32, #tpu.memory_space<vmem>>, vector<8x128xf32>
    tpu.vector_store %arg7[%c0_7, %c0_8], %8 {strides = array<i32>} : memref<8x128xf32, #tpu.memory_space<vmem>>, vector<8x128xf32>,
    return
  }
  func.func @transform_0(%arg0: i32, %arg1: i32, %arg2: i32) -> (i32, i32) {
    %c0_i32 = arith.constant 0 : i32
    return %arg0, %arg2 : i32, i32
  }
  func.func @transform_1(%arg0: i32, %arg1: i32, %arg2: i32) -> (i32, i32) {
    %c0_i32 = arith.constant 0 : i32
    return %arg2, %arg1 : i32, i32
  }
  func.func @transform_2(%arg0: i32, %arg1: i32, %arg2: i32) -> (i32, i32) {
    %c0_i32 = arith.constant 0 : i32
    %c0_i32_0 = arith.constant 0 : i32
    return %c0_i32, %arg1 : i32, i32
  }
  func.func @transform_3(%arg0: i32, %arg1: i32, %arg2: i32) -> (i32, i32) {
    %c0_i32 = arith.constant 0 : i32
    %c0_i32_0 = arith.constant 0 : i32
    return %c0_i32, %arg1 : i32, i32
  }
  func.func @transform_4(%arg0: i32, %arg1: i32, %arg2: i32) -> (i32, i32) {
    %c0_i32 = arith.constant 0 : i32
    return %arg0, %arg1 : i32, i32
  }
}

</mosaic_0001>

<llo_original>
// kernel: wn_linear.1
$region0: #{wn_linear.1}
  #allocation0 [shape = 'u32[]', space=smem, size = 0x4, offset = 0x4, fixed_abs, tag = 'smem constant byte address 0x4 - core index']
  #allocation1 [shape = 'u32[72,128]{1,0:T(1,128)}', space=vmem, size = 0x9000, scoped, tag = 'internal scratch']
  %s0 = inlined_call_operand.vmem [shape: f32[8,32], index: 0, kind: input, shape index: {}]
  %s1 = inlined_call_operand.vmem [shape: f32[32,128], index: 1, kind: input, shape index: {}]
  %s2 = inlined_call_operand.vmem [shape: f32[1,128], index: 2, kind: input, shape index: {}]
  %s3 = inlined_call_operand.vmem [shape: f32[1,128], index: 3, kind: input, shape index: {}]
  %s4 = inlined_call_operand.hbm [shape: f32[8,128], index: 4, kind: output, shape index: {}]
  %s5 = sld [smem:[#allocation0]]
  $region26: #{wn_linear.1} parent=0
    _
  %s7 = ssub.s32 1, %s5
  %s8 = scalar_select 0, %s7, %s5
  $region1: #{wn_linear.1} parent=0
    #allocation2 [shape = 'u8[4096]{0}', space=vmem, size = 0x1000, scoped, tag = 'output window, operand 0, single buffered']
    #allocation3 [shape = 's32[1]{0}', space=sflag, size = 0x4, scoped, tag = 'scoped memory for wn_linear.1']
    %9 = vsyncpa [#allocation3], 0
    // Predicated region
    $region2: #{wn_linear.1} parent=1 // pred_check
      _
    $region3: #{wn_linear.1} parent=1 // pred_check_branch
      %11 = sbr.rel (0) target = $region5
    $region4: #{wn_linear.1} parent=1 // pred_region
      _
    $region5: #{wn_linear.1} parent=1 // pred_fallthru
      _
    // Predicated region
    $region6: #{wn_linear.1} parent=1 // pred_check
      _
    $region7: #{wn_linear.1} parent=1 // pred_check_branch
      %13 = sbr.rel (0) target = $region9
    $region8: #{wn_linear.1} parent=1 // pred_region
      _
    $region9: #{wn_linear.1} parent=1 // pred_fallthru
      _
    // Predicated region
    $region10: #{wn_linear.1} parent=1 // pred_check
      _
    $region11: #{wn_linear.1} parent=1 // pred_check_branch
      %15 = sbr.rel (0) target = $region13
    $region12: #{wn_linear.1} parent=1 // pred_region
      _
    $region13: #{wn_linear.1} parent=1 // pred_fallthru
      _
    // Predicated region
    $region14: #{wn_linear.1} parent=1 // pred_check
      _
    $region15: #{wn_linear.1} parent=1 // pred_check_branch
      %17 = sbr.rel (0) target = $region17
    $region16: #{wn_linear.1} parent=1 // pred_region
      _
    $region17: #{wn_linear.1} parent=1 // pred_fallthru
      _
    %v18 = vld [vmem:[%s0] sm:$0xff]
    %v19 = vld [vmem:[%s1] sm:$0xff]
    %v20 = vld [vmem:[%s1 + $0x8] sm:$0xff]
    %v21 = vld [vmem:[%s1 + $0x10] sm:$0xff]
    %v22 = vld [vmem:[%s1 + $0x18] sm:$0xff]
    %vm23 = vcmask 261120
    %v25 = vsel %vm23, %v18, 0
    %27 = vmatpush.msra.mxu0 0.0
    %28 = vmatpush.msra.mxu0 0.0
    %29 = vmatpush.msra.mxu0 0.0
    %30 = vmatpush.msra.mxu0 0.0
    %31 = vmatpush.msra.mxu0 0.0
    %32 = vmatpush.msra.mxu0 0.0
    %33 = vmatpush.msra.mxu0 0.0
    %34 = vmatpush.msra.mxu0 0.0
    %35 = vmatpush.msra.mxu0 0.0
    %36 = vmatpush.msra.mxu0 0.0
    %37 = vmatpush.msra.mxu0 0.0
    %38 = vmatpush.msra.mxu0 0.0
    %39 = vmatpush.msra.mxu0 %v22
    %40 = vmatpush.msra.mxu0 %v21
    %41 = vmatpush.msra.mxu0 %v20
    %42 = vmatpush.msra.mxu0 %v19
    %43 = vmatmul.f32.gmra.mxu0 %v25
    %v44 = vpop.f32.mrf.mxu0
    %v45 = vadd.f32 0.0, %v44
    %46 = vdwg.mxu0
    %v47 = vld [vmem:[%s2] sm:$0x1]
    %v49 = vperm.slane %v47, 0
    %v51 = vmul.f32 %v45, %v49
    %v52 = vld [vmem:[%s3] sm:$0x1]
    %v54 = vperm.slane %v52, 0
    %v56 = vadd.f32 %v51, %v54
    %57 = vst [vmem:[#allocation2] sm:$0xff] %v56
    // Predicated region
    $region18: #{wn_linear.1} parent=1 // pred_check
      _
    $region19: #{wn_linear.1} parent=1 // pred_check_branch
      %59 = sbr.rel (0) target = $region21
    $region20: #{wn_linear.1} parent=1 // pred_region
      %61 = vsyncadd [#allocation3], 0
      %s63 = sshll.u32 [#allocation2], 4
      %s64 = int_to_ptr.vmem [resolvable:$true] %s63
      %s65 = sshll.u32 %s4, 4
      %s66 = int_to_ptr.hbm [resolvable:$true] %s65
      %68 = dma.vmem_to_hbm [thread:$0]  %s64, 128, %s66, [#allocation3]
    $region21: #{wn_linear.1} parent=1 // pred_fallthru
      _
    // Predicated region
    $region22: #{wn_linear.1} parent=1 // pred_check
      _
    $region23: #{wn_linear.1} parent=1 // pred_check_branch
      %70 = sbr.rel (0) target = $region25
    $region24: #{wn_linear.1} parent=1 // pred_region
      %72 = dma.done [#allocation3], 128
    $region25: #{wn_linear.1} parent=1 // pred_fallthru
      _
    %73 = vsyncpa [#allocation3], 1

// kernel: wn_linear.1
$region0: #{wn_linear.1}
  #allocation0 [shape = 'u32[]', space=smem, size = 0x4, offset = 0x4, fixed_abs, tag = 'smem constant byte address 0x4 - core index']
  #allocation1 [shape = 'u32[72,128]{1,0:T(1,128)}', space=vmem, size = 0x9000, scoped, tag = 'internal scratch']
  %s0 = inlined_call_operand.vmem [shape: f32[8,32], index: 0, kind: input, shape index: {}]
  %s1 = inlined_call_operand.vmem [shape: f32[32,128], index: 1, kind: input, shape index: {}]
  %s2 = inlined_call_operand.vmem [shape: f32[1,128], index: 2, kind: input, shape index: {}]
  %s3 = inlined_call_operand.vmem [shape: f32[1,128], index: 3, kind: input, shape index: {}]
  %s4 = inlined_call_operand.hbm [shape: f32[8,128], index: 4, kind: output, shape index: {}]
  %s5 = sld [smem:[#allocation0]]
  $region26: #{wn_linear.1} parent=0
    _
  %s7 = ssub.s32 1, %s5
  %s8 = scalar_select 0, %s7, %s5
  $region1: #{wn_linear.1} parent=0
    #allocation2 [shape = 'u8[4096]{0}', space=vmem, size = 0x1000, scoped, tag = 'output window, operand 0, single buffered']
    #allocation3 [shape = 's32[1]{0}', space=sflag, size = 0x4, scoped, tag = 'scoped memory for wn_linear.1']
    %9 = vsyncpa [#allocation3], 0
    // Predicated region
    $region2: #{wn_linear.1} parent=1 // pred_check
      _
    $region3: #{wn_linear.1} parent=1 // pred_check_branch
      %11 = sbr.rel (0) target = $region5
    $region4: #{wn_linear.1} parent=1 // pred_region
      _
    $region5: #{wn_linear.1} parent=1 // pred_fallthru
      _
    // Predicated region
    $region6: #{wn_linear.1} parent=1 // pred_check
      _
    $region7: #{wn_linear.1} parent=1 // pred_check_branch
      %13 = sbr.rel (0) target = $region9
    $region8: #{wn_linear.1} parent=1 // pred_region
      _
    $region9: #{wn_linear.1} parent=1 // pred_fallthru
      _
    // Predicated region
    $region10: #{wn_linear.1} parent=1 // pred_check
      _
    $region11: #{wn_linear.1} parent=1 // pred_check_branch
      %15 = sbr.rel (0) target = $region13
    $region12: #{wn_linear.1} parent=1 // pred_region
      _
    $region13: #{wn_linear.1} parent=1 // pred_fallthru
      _
    // Predicated region
    $region14: #{wn_linear.1} parent=1 // pred_check
      _
    $region15: #{wn_linear.1} parent=1 // pred_check_branch
      %17 = sbr.rel (0) target = $region17
    $region16: #{wn_linear.1} parent=1 // pred_region
      _
    $region17: #{wn_linear.1} parent=1 // pred_fallthru
      _
    %v18 = vld [vmem:[%s0] sm:$0xff]
    %v19 = vld [vmem:[%s1] sm:$0xff]
    %v20 = vld [vmem:[%s1 + $0x8] sm:$0xff]
    %v21 = vld [vmem:[%s1 + $0x10] sm:$0xff]
    %v22 = vld [vmem:[%s1 + $0x18] sm:$0xff]
    %vm23 = vcmask 261120
    %v25 = vsel %vm23, %v18, 0
    %27 = vmatpush.msra.mxu0 0.0
    %28 = vmatpush.msra.mxu0 0.0
    %29 = vmatpush.msra.mxu0 0.0
    %30 = vmatpush.msra.mxu0 0.0
    %31 = vmatpush.msra.mxu0 0.0
    %32 = vmatpush.msra.mxu0 0.0
    %33 = vmatpush.msra.mxu0 0.0
    %34 = vmatpush.msra.mxu0 0.0
    %35 = vmatpush.msra.mxu0 0.0
    %36 = vmatpush.msra.mxu0 0.0
    %37 = vmatpush.msra.mxu0 0.0
    %38 = vmatpush.msra.mxu0 0.0
    %39 = vmatpush.msra.mxu0 %v22
    %40 = vmatpush.msra.mxu0 %v21
    %41 = vmatpush.msra.mxu0 %v20
    %42 = vmatpush.msra.mxu0 %v19
    %43 = vmatmul.f32.gmra.mxu0 %v25
    %v44 = vpop.f32.mrf.mxu0
    %v45 = vadd.f32 0.0, %v44
    %46 = vdwg.mxu0
    %v47 = vld [vmem:[%s2] sm:$0x1]
    %v49 = vperm.slane %v47, 0
    %v51 = vmul.f32 %v45, %v49
    %v52 = vld [vmem:[%s3] sm:$0x1]
    %v54 = vperm.slane %v52, 0
    %v56 = vadd.f32 %v51, %v54
    %57 = vst [vmem:[#allocation2] sm:$0xff] %v56
    // Predicated region
    $region18: #{wn_linear.1} parent=1 // pred_check
      _
    $region19: #{wn_linear.1} parent=1 // pred_check_branch
      %59 = sbr.rel (0) target = $region21
    $region20: #{wn_linear.1} parent=1 // pred_region
      %61 = vsyncadd [#allocation3], 0
      %s63 = sshll.u32 [#allocation2], 4
      %s64 = int_to_ptr.vmem [resolvable:$true] %s63
      %s65 = sshll.u32 %s4, 4
      %s66 = int_to_ptr.hbm [resolvable:$true] %s65
      %68 = dma.vmem_to_hbm [thread:$0]  %s64, 128, %s66, [#allocation3]
    $region21: #{wn_linear.1} parent=1 // pred_fallthru
      _
    // Predicated region
    $region22: #{wn_linear.1} parent=1 // pred_check
      _
    $region23: #{wn_linear.1} parent=1 // pred_check_branch
      %70 = sbr.rel (0) target = $region25
    $region24: #{wn_linear.1} parent=1 // pred_region
      %72 = dma.done [#allocation3], 128
    $region25: #{wn_linear.1} parent=1 // pred_fallthru
      _
    %73 = vsyncpa [#allocation3], 1

</llo_original>
